<compile_context>
chip_gen: v7x
topology: tpu7x:2x2x1
jax: 0.10.0
libtpu: 0.0.40
codegen_flags: <defaults>
</compile_context>

<pallas_src>
import jax
import jax.numpy as jnp
from jax.experimental import pallas as pl
from jax.experimental.pallas import tpu as pltpu


_MAX_CHUNKS = 8                    # max concurrent DMA descriptors in flight
_CHUNK_TARGET_BYTES = 4 << 20      # aim for >= ~4 MiB per DMA chunk
_LANES = 128                       # row width of the 2D slab (chunk granularity)


def _full_copy_kernel(x_ref, o_ref, sem):
    # Single whole-array HBM->HBM DMA (any shape / dtype, no constraints).
    cp = pltpu.make_async_copy(x_ref, o_ref, sem.at[0])
    cp.start()
    cp.wait()


def _make_chunked_copy_kernel(chunks):
    """Kernel issuing one HBM->HBM DMA per contiguous row-chunk, all in flight."""
    def kernel(x_ref, o_ref, sem):
        copies = []
        for i, (start, size) in enumerate(chunks):
            cp = pltpu.make_async_copy(
                x_ref.at[pl.ds(start, size), :],
                o_ref.at[pl.ds(start, size), :],
                sem.at[i],
            )
            cp.start()              # start every chunk first ...
            copies.append(cp)
        for cp in copies:           # ... then wait, so all DMAs overlap
            cp.wait()
    return kernel


def _dma_pallas_call(kernel, x, n_sems):
    """Run `kernel` with both operands left in HBM (pl.ANY) + DMA semaphores."""
    nbytes = x.size * x.dtype.itemsize
    return pl.pallas_call(
        kernel,
        out_shape=jax.ShapeDtypeStruct(x.shape, x.dtype),
        in_specs=[pl.BlockSpec(memory_space=pl.ANY)],
        out_specs=pl.BlockSpec(memory_space=pl.ANY),
        scratch_shapes=[pltpu.SemaphoreType.DMA((n_sems,))],
        cost_estimate=pl.CostEstimate(
            flops=0, transcendentals=0, bytes_accessed=2 * nbytes),
    )(x)


def _materialized_copy(weight: jax.Array, *, num_chunks: int | None = None) -> jax.Array:
    """Fresh copy of `weight` via direct HBM->HBM DMA (no VMEM staging)."""
    total = weight.size
    if total == 0:
        return weight
    nbytes = total * weight.dtype.itemsize

    if total % _LANES != 0:
        # Arbitrary size: one whole-array DMA; no padding / slicing needed.
        return _dma_pallas_call(_full_copy_kernel, weight, 1)

    rows = total // _LANES
    if num_chunks is None:
        num_chunks = nbytes // _CHUNK_TARGET_BYTES
    n_chunks = int(max(1, min(_MAX_CHUNKS, rows, num_chunks)))

    if n_chunks == 1:
        # Small parameter: a single DMA already saturates; skip the reshape.
        return _dma_pallas_call(_full_copy_kernel, weight, 1)

    rows_per = -(-rows // n_chunks)          # ceil division, static Python int
    chunks = []
    start = 0
    while start < rows:
        size = min(rows_per, rows - start)
        chunks.append((start, size))
        start += size

    x2d = weight.reshape(rows, _LANES)       # free row-major reshape (metadata)
    out2d = _dma_pallas_call(_make_chunked_copy_kernel(chunks), x2d, len(chunks))
    return out2d.reshape(weight.shape)


def generated_image_forward(weight: jax.Array, *, materialize: bool = False) -> jax.Array:
    """Pallas equivalent of GeneratedImage.forward() -> weight.

    Default (materialize=False): return the parameter directly — the forward
    pass is a pure identity, so the fastest correct implementation moves zero
    bytes (zero bytes beats any roofline-tuned memcpy; if the real need is
    buffer ownership, prefer XLA donation/input_output_aliases at the jit
    boundary).  materialize=True runs the concurrent HBM->HBM DMA copy when a
    fresh output buffer is explicitly required.
    """
    if not materialize:
        return weight
    return _materialized_copy(weight)


if __name__ == "__main__":
    # Deterministic parameter init mimicking torch.rand(*image_shape): U[0, 1)
    image_shape = (2, 4, 16, 16)      # small NCHW image parameter
    key = jax.random.PRNGKey(0)
    k0, k1, k2 = jax.random.split(key, 3)
    weight = jax.random.uniform(k0, image_shape, dtype=jnp.float32)

    # Optimal forward path: zero-cost identity (matches forward() semantics).
    out_fast = generated_image_forward(weight)
    # Pallas kernel path: direct HBM->HBM DMA copy.
    out_copy = generated_image_forward(weight, materialize=True)

    # Exercise the multi-chunk concurrent-DMA path (forced 4 chunks in flight).
    w_big = jax.random.uniform(k1, (1, 3, 128, 256), dtype=jnp.float32)
    out_big = _materialized_copy(w_big, num_chunks=4)

    # Non-128-divisible size: single whole-array DMA, no pad / slice fallback.
    w_odd = jax.random.uniform(k2, (2, 3, 15, 17), dtype=jnp.float32)
    out_odd = _materialized_copy(w_odd)

    out_fast, out_copy, out_big, out_odd = jax.block_until_ready(
        (out_fast, out_copy, out_big, out_odd))

    assert out_fast.shape == image_shape and out_copy.shape == image_shape
    assert out_copy.dtype == jnp.float32
    assert jnp.array_equal(out_fast, weight), "forward() must return the weight exactly"
    assert jnp.array_equal(out_copy, weight), "materialized copy must equal the weight"
    assert jnp.array_equal(out_big, w_big), "chunked DMA copy must equal the weight"
    assert jnp.array_equal(out_odd, w_odd), "full-array DMA copy must equal the weight"

    print("KERNEL_OK")
</pallas_src>

<mosaic_0001>
module attributes {stable_mosaic.version = 11 : i64} {
  func.func @_full_copy_kernel(%arg0: memref<2x4x16x16xf32, #tpu.memory_space<any>>, %arg1: memref<2x4x16x16xf32, #tpu.memory_space<any>>, %arg2: memref<1x!tpu.dma_semaphore, #tpu.memory_space<semaphore_mem>>) attributes {dimension_semantics = [], scalar_prefetch = 0 : i64, scratch_operands = 1 : i64, tpu.core_type = #tpu.core_type<tc>} {
    %c0_i32 = arith.constant 0 : i32
    %0 = tpu.memref_slice %arg2[%c0_i32] : memref<1x!tpu.dma_semaphore, #tpu.memory_space<semaphore_mem>> -> memref<1x!tpu.dma_semaphore, #tpu.memory_space<semaphore_mem>>
    %1 = tpu.memref_squeeze %0 : memref<1x!tpu.dma_semaphore, #tpu.memory_space<semaphore_mem>> -> memref<!tpu.dma_semaphore, #tpu.memory_space<semaphore_mem>>
    tpu.enqueue_dma source(%arg0 : memref<2x4x16x16xf32, #tpu.memory_space<any>>) target(%arg1 : memref<2x4x16x16xf32, #tpu.memory_space<any>>) target_semaphore(%1 : memref<!tpu.dma_semaphore, #tpu.memory_space<semaphore_mem>>)
    %c0_i32_0 = arith.constant 0 : i32
    %2 = tpu.memref_slice %arg2[%c0_i32_0] : memref<1x!tpu.dma_semaphore, #tpu.memory_space<semaphore_mem>> -> memref<1x!tpu.dma_semaphore, #tpu.memory_space<semaphore_mem>>
    %3 = tpu.memref_squeeze %2 : memref<1x!tpu.dma_semaphore, #tpu.memory_space<semaphore_mem>> -> memref<!tpu.dma_semaphore, #tpu.memory_space<semaphore_mem>>
    tpu.wait_dma2 semaphore(%3 : memref<!tpu.dma_semaphore, #tpu.memory_space<semaphore_mem>>) src(%arg0 : memref<2x4x16x16xf32, #tpu.memory_space<any>>) dst(%arg1 : memref<2x4x16x16xf32, #tpu.memory_space<any>>)
    return
  }
}

</mosaic_0001>

<llo_original>
// kernel: tpu_custom_call.1
$region0: #{tpu_custom_call.1}
  #allocation0 [shape = 'u32[]', space=smem, size = 0x4, offset = 0x4, fixed_abs, tag = 'smem constant byte address 0x4 - core index']
  #allocation1 [shape = 'u32[144,128]{1,0:T(1,128)}', space=vmem, size = 0x12000, scoped, tag = 'internal scratch']
  #allocation2 [shape = 's32[1]{0}', space=sflag, size = 0x4, scoped, tag = 'scratch operand']
  #allocation3 [shape = 's32[]', space=sflag, size = 0x4, offset = 0, fixed_abs, tag = 'sflag constant byte address 0x0 - dummy sync flag']
  #allocation4 [shape = 'u32[0]{0}', space=smem, size = 0, offset = 0, fixed_abs, tag = 'smem constant byte address 0x0 - null']
  %s0 = inlined_call_operand.hbm [shape: f32[2,4,16,16], index: 0, kind: input, shape index: {}]
  %s1 = inlined_call_operand.hbm [shape: f32[2,4,16,16], index: 1, kind: output, shape index: {}]
  %s2 = sld [smem:[#allocation0]]
  $region2: #{tpu_custom_call.1} parent=0
    _
  %s4 = ssub.s32 1, %s2
  %s5 = scalar_select 0, %s4, %s2
  %s7 = sshll.u32 1, 14
  %s8 = sxor.u32 4294967295, %s7
  %s11 = sshll.u32 3, 24
  %s12 = sxor.u32 4294967295, %s11
  %s13 = sand.u32 0, %s12
  %s15 = sor.u32 %s13, 0
  %18 = dma.general %s0, 2048, %s1, [#allocation2], [#allocation3], [#allocation4], %s15, 0
  %s19 = smul.u32 2, 4
  %s20 = smul.u32 %s19, 16
  %s21 = smul.u32 %s20, 1
  %s22 = sshll.u32 %s21, 4
  %23 = dma.done [#allocation2], %s22
  %24 = vsyncmov [#allocation2]
  %s25 = vpop.sfrf %24
  %p26 = scmp.eq.s32.totalorder %s25, 0
  %p27 = pneg %p26
  %29 = shalt.err (%p27)

</llo_original>
